<compile_context>
chip_gen: v5e
topology: v5e:2x2
jax: 0.10.0
libtpu: 0.0.40
codegen_flags: <defaults>
</compile_context>

<pallas_src>
import functools

import jax
import jax.numpy as jnp
from jax import lax
from jax.experimental import pallas as pl
from jax.experimental.pallas import tpu as pltpu
from jax.scipy.linalg import cho_solve, solve_triangular


# ---------------------------------------------------------------------------
# chip-aware budgets (v5e/v6e: 128 MiB VMEM, 1 TC; v7x: 64 MiB VMEM, 2 TCs)
# ---------------------------------------------------------------------------
def _tpu_budgets():
    """Returns (vmem_limit_bytes, per-step block byte budget, num TensorCores)."""
    vmem_cap = 128 << 20
    try:
        info = pltpu.get_tpu_info()
        vmem_cap = int(getattr(info, "vmem_capacity_bytes", vmem_cap))
    except Exception:                     # query unavailable -> conservative default
        pass
    kind = ""
    try:
        kind = jax.devices()[0].device_kind.lower()
    except Exception:
        pass
    if vmem_cap <= (64 << 20) or "v7" in kind:
        # v7x: 64 MiB per TensorCore -- keep the double-buffered footprint well
        # under the cap (headroom for Mosaic internal scratch); 2 TCs per chip
        # so parallel grid extents should stay even.
        return 44 << 20, 6 << 20, 2
    # v5e / v6e: 128 MiB physical VMEM (default scoped limit is far lower),
    # single TensorCore -> bigger tiles amortize the ~0.35 us/step overhead.
    return 64 << 20, 12 << 20, 1


# ---------------------------------------------------------------------------
# tile-size helpers
# ---------------------------------------------------------------------------
def _pick_sample_block(S, bytes_per_sample, *, budget, prefer_even, cap=8):
    """Largest divisor of S within budget; even grid preferred only on 2-TC chips."""
    cap = max(1, min(cap, S, budget // max(1, bytes_per_sample)))
    if prefer_even:
        for d in range(cap, 0, -1):
            if S % d == 0 and (S // d) % 2 == 0:
                return d
    for d in range(cap, 0, -1):
        if S % d == 0:
            return d
    return 1


def _pick_row_block(N, bytes_per_row, *, budget, align=8, cap=2048):
    """Row tile for the apply kernel.

    Full N if it fits the budget, else the largest 256/128/`align`-aligned exact
    divisor, else an aligned tile with a masked tail block (grid uses pl.cdiv) --
    never the silent full-N fallback that could blow VMEM on v7x.
    """
    cap = min(cap, max(1, budget // max(1, bytes_per_row)))
    if cap >= N:
        return N
    cap = max(align, cap)
    for step in (256, 128, align):
        if step % align:
            continue
        d = cap - cap % step
        while d >= step:
            if N % d == 0:
                return d
            d -= step
    return max(align, cap - cap % align)


# ---------------------------------------------------------------------------
# Pallas kernel 1: fused block-diagonal gram
#   xgat[s] = [Xb^T ; (ones if bias) ; u_pad]  of shape (F + J, R)
#   For block j: res = (xgat * e_j) @ xgat^T   (trans_b MXU matmul)
#     res[:F, :F]  -> XLX block j   (F, F)
#     res[F+j, :F] -> XLY block j   (F,)   -- fused, no separate skinny matmul
# ---------------------------------------------------------------------------
def _gram_kernel(F, xgat_ref, w_ref, xlx_ref, xly_ref):
    # Small static loops: sb <= 8 and J is tiny, so full unrolling keeps vreg
    # pressure bounded.  (Switch to lax.fori_loop(unroll=True) if F*R grows.)
    J = w_ref.shape[0]
    for s in range(xgat_ref.shape[0]):
        xat = xgat_ref[s]                              # (F + J, R), f32
        for j in range(J):
            scaled = xat * w_ref[j:j + 1, :]           # sublane-broadcast of e for block j
            res = lax.dot_general(scaled, xat, (((1,), (1,)), ((), ())),
                                  preferred_element_type=jnp.float32)   # (F+J, F+J)
            xlx_ref[s, j] = res[:F, :F]
            xly_ref[s, j] = res[F + j:F + j + 1, :F]


def gram_pallas(xgat, w, *, F, sb, vmem_limit=None):
    S, FJ, R = xgat.shape
    J = w.shape[0]
    assert FJ == F + J and S % sb == 0
    if vmem_limit is None:
        vmem_limit = _tpu_budgets()[0]
    return pl.pallas_call(
        functools.partial(_gram_kernel, F),
        out_shape=(jax.ShapeDtypeStruct((S, J, F, F), jnp.float32),
                   jax.ShapeDtypeStruct((S, J, 1, F), jnp.float32)),
        grid=(S // sb,),
        in_specs=[
            pl.BlockSpec((sb, FJ, R), lambda si: (si, 0, 0)),
            pl.BlockSpec((J, R), lambda si: (0, 0)),
        ],
        out_specs=(
            pl.BlockSpec((sb, J, F, F), lambda si: (si, 0, 0, 0)),
            pl.BlockSpec((sb, J, 1, F), lambda si: (si, 0, 0, 0)),
        ),
        compiler_params=pltpu.CompilerParams(
            dimension_semantics=("parallel",),
            vmem_limit_bytes=vmem_limit),
    )(xgat, w)


# ---------------------------------------------------------------------------
# Pallas kernel 2: result = X @ W_main^T + bias
#   X and W^T arrive already cast to the MXU compute dtype (bf16 by default),
#   the bias is a separate small f32 row (f32 VPU add), accumulation is f32,
#   and W^T stays resident across the N tiling axis.
# ---------------------------------------------------------------------------
def _apply_kernel(has_bias, *refs):
    if has_bias:
        x_ref, wt_ref, b_ref, o_ref = refs
    else:
        x_ref, wt_ref, o_ref = refs
    for s in range(x_ref.shape[0]):        # unrolled over the per-step sample batch
        y = jnp.dot(x_ref[s], wt_ref[s], preferred_element_type=jnp.float32)
        if has_bias:
            y = y + b_ref[s]               # (1, O) f32 bias row
        o_ref[s] = y.astype(o_ref.dtype)


def apply_pallas(x, wt, b, *, sb, nt, out_dtype=jnp.float32, vmem_limit=None):
    S, N, cin = x.shape
    O = wt.shape[-1]
    if vmem_limit is None:
        vmem_limit = _tpu_budgets()[0]
    grid = (S // sb, pl.cdiv(N, nt))       # masked tail block if nt does not divide N
    in_specs = [
        pl.BlockSpec((sb, nt, cin), lambda si, ni: (si, ni, 0)),
        pl.BlockSpec((sb, cin, O), lambda si, ni: (si, 0, 0)),   # W^T resident over N tiles
    ]
    args = [x, wt]
    if b is not None:
        in_specs.append(pl.BlockSpec((sb, 1, O), lambda si, ni: (si, 0, 0)))
        args.append(b)
    # TODO(synk): sweep pipeline_mode=pl.Buffered(3) on the X stream if DMA is
    # still exposed after the bf16 change (mostly relevant on v7x).
    return pl.pallas_call(
        functools.partial(_apply_kernel, b is not None),
        out_shape=jax.ShapeDtypeStruct((S, N, O), out_dtype),
        grid=grid,
        in_specs=in_specs,
        out_specs=pl.BlockSpec((sb, nt, O), lambda si, ni: (si, ni, 0)),
        compiler_params=pltpu.CompilerParams(
            dimension_semantics=("parallel", "parallel"),
            vmem_limit_bytes=vmem_limit),
    )(*args)


# ---------------------------------------------------------------------------
# Full forward (glue in plain JAX, hot paths in Pallas)
# ---------------------------------------------------------------------------
def gi_linear_full_prec_forward(X, params, *, in_features, out_features, bias,
                                inducing_batch, key,
                                apply_compute_dtype=jnp.bfloat16,
                                out_dtype=jnp.float32):
    # NOTE: the bf16 apply path loses accuracy roughly ~ sqrt(in_features)*eps_bf16;
    # pass apply_compute_dtype=jnp.float32 for a full-precision apply.
    S, N, d_in = X.shape
    assert d_in == in_features
    M = inducing_batch
    F = in_features + int(bias)
    D = F * out_features                   # in_features of the inner weights module
    assert 1 <= M <= N * out_features

    vmem_limit, block_budget, n_tc = _tpu_budgets()

    # Block structure of X_trans (never materialized): inducing row m sits in
    # row block j = m // N and only touches the F-wide column block j, so the
    # gram is block-diagonal with J = ceil(M / N) data-carrying blocks.
    J = -(-M // N)
    R = M if J == 1 else N                 # Xb rows each block contracts over

    X32 = X.astype(jnp.float32)
    e = jnp.exp(params["log_prec_lr"] * params["log_prec_scaled"]).reshape(-1)
    e = e.astype(jnp.float32)                                              # (M,)
    u = params["u"].reshape(-1).astype(jnp.float32)                        # (M,)
    pad = J * R - M
    w = jnp.pad(e, (0, pad)).reshape(J, R)                                 # per-block e rows
    u_pad = jnp.pad(u, (0, pad)).reshape(J, R)

    # Transposed, u-augmented inducing block: rows 0..F-1 are Xb^T (bias row of
    # ones fused), rows F+j carry u for block j so XLY falls out of the same
    # MXU matmul as XLX.  Single input stream to the gram kernel.
    parts = [jnp.swapaxes(X32[:, :R, :], 1, 2)]
    if bias:
        parts.append(jnp.ones((S, 1, R), jnp.float32))
    parts.append(jnp.broadcast_to(u_pad[None], (S, J, R)))
    xgat = jnp.concatenate(parts, axis=1)                                  # (S, F + J, R)

    gram_bytes = 4 * ((F + J) * R + J * R + J * F * (F + 2))
    sb_gram = _pick_sample_block(S, gram_bytes, budget=block_budget,
                                 prefer_even=(n_tc >= 2))
    XLX, XLY = gram_pallas(xgat, w, F=F, sb=sb_gram, vmem_limit=vmem_limit)

    # NealPrior over the inner D-dim weight vector: precision = D * I, so each
    # FxF diagonal block sees D * I_F.  No extra jitter (matches the module).
    prior_prec = jnp.float32(D)
    Z = jax.random.normal(key, (S, out_features, F), dtype=jnp.float32)

    # TODO(synk): torch.linalg.cholesky / cholesky_solve / triangular_solve have
    # no clean Pallas TPU equivalent -- done in plain JAX on the small FxF blocks.
    prec = XLX.reshape(S * J, F, F) + prior_prec * jnp.eye(F, dtype=jnp.float32)
    L = jnp.linalg.cholesky(prec)

    def _solve(L_b, xly_b, z_b):
        mean = cho_solve((L_b, True), xly_b)                      # Sigma @ XLY
        dW = solve_triangular(L_b, z_b, lower=True, trans='T')    # L^T dW = Z
        return mean + dW

    W_act = jax.vmap(_solve)(L, XLY.reshape(S * J, F)[..., None],
                             Z[:, :J, :].reshape(S * J, F, 1)).reshape(S, J, F)
    if J < out_features:
        # blocks with no inducing data: prec = D*I exactly, so W = Z / sqrt(D)
        W_rest = Z[:, J:, :] * (1.0 / jnp.sqrt(prior_prec))
        W = jnp.concatenate([W_act, W_rest], axis=1)              # (S, out, F)
    else:
        W = W_act

    # TODO(synk): logP/logQ KL bookkeeping (self.logpq) is a module side effect
    # and not part of the returned tensor; omitted here.

    cd = jnp.dtype(apply_compute_dtype)
    Xa = X.astype(cd)                                             # cast ONCE in HBM
    WT_main = jnp.swapaxes(W[:, :, :in_features], 1, 2).astype(cd)        # (S, in, out)
    b_row = (jnp.swapaxes(W[:, :, in_features:], 1, 2).astype(jnp.float32)
             if bias else None)                                           # (S, 1, out) f32

    align = 16 if cd.itemsize < 4 else 8
    nt = _pick_row_block(N, cd.itemsize * in_features,
                         budget=block_budget, align=align)
    n_tiles = pl.cdiv(N, nt)
    apply_bytes = (nt * in_features * cd.itemsize
                   + in_features * out_features * cd.itemsize
                   + out_features * 4
                   + nt * out_features * jnp.dtype(out_dtype).itemsize)
    sb_apply = _pick_sample_block(S, apply_bytes, budget=block_budget,
                                  prefer_even=(n_tc >= 2 and n_tiles % 2 == 1))
    return apply_pallas(Xa, WT_main, b_row, sb=sb_apply, nt=nt,
                        out_dtype=out_dtype, vmem_limit=vmem_limit)


# ---------------------------------------------------------------------------
# pure-JAX reference: the original dense PyTorch math (X_trans materialized)
# ---------------------------------------------------------------------------
def reference_forward(X, params, *, in_features, out_features, bias,
                      inducing_batch, key):
    S, N, _ = X.shape
    M = inducing_batch
    F = in_features + int(bias)
    D = F * out_features
    X = X.astype(jnp.float32)
    Xb = jnp.concatenate([X, jnp.ones((S, N, 1), jnp.float32)], -1) if bias else X
    zeros = jnp.zeros_like(Xb)
    X_trans = jnp.concatenate(
        [jnp.concatenate([Xb if i == j else zeros for i in range(out_features)], -1)
         for j in range(out_features)], axis=-2)
    Xi = X_trans[:, :M, :]
    e = jnp.exp(params["log_prec_lr"] * params["log_prec_scaled"]).reshape(-1)
    u = params["u"].reshape(-1).astype(jnp.float32)
    XLX = jnp.einsum('smd,m,sme->sde', Xi, e, Xi)
    XLY = jnp.einsum('smd,m,m->sd', Xi, e, u)[..., None]
    prec = XLX + jnp.float32(D) * jnp.eye(D, dtype=jnp.float32)
    L = jnp.linalg.cholesky(prec)
    Z = jax.random.normal(key, (S, out_features, F), dtype=jnp.float32).reshape(S, D, 1)

    def _solve(L_s, xly_s, z_s):
        mean = cho_solve((L_s, True), xly_s)
        dW = solve_triangular(L_s, z_s, lower=True, trans='T')
        return mean + dW

    sample = jax.vmap(_solve)(L, XLY, Z)
    W = sample[..., 0].reshape(S, out_features, F)
    return jnp.einsum('snf,sof->sno', Xb, W)


if __name__ == "__main__":
    key = jax.random.PRNGKey(0)
    kx1, ku1, kz1, kx2, ku2, kz2 = jax.random.split(key, 6)
    log_prec_init, log_prec_lr = -4.0, 1.0

    def make_params(ku, M):
        return {
            "log_prec_lr": jnp.float32(log_prec_lr),
            "log_prec_scaled": (log_prec_init / log_prec_lr)
                               * jnp.ones((1, 1, M), jnp.float32),
            "u": jax.random.normal(ku, (1, M, 1), dtype=jnp.float32),
        }

    # --- case 1: inducing_batch <= N (single data-carrying block) ----------
    S, N, in_features, out_features, bias, M = 2, 16, 7, 4, True, 8
    X = jax.random.normal(kx1, (S, N, in_features), dtype=jnp.float32)
    params = make_params(ku1, M)
    kw = dict(in_features=in_features, out_features=out_features, bias=bias,
              inducing_batch=M, key=kz1)

    out = gi_linear_full_prec_forward(X, params, **kw)                   # bf16 MXU apply
    out_f32 = gi_linear_full_prec_forward(X, params,
                                          apply_compute_dtype=jnp.float32, **kw)
    out, out_f32 = jax.block_until_ready((out, out_f32))
    assert out.shape == (S, N, out_features) and out.ndim == 3

    ref = reference_forward(X, params, **kw)
    assert jnp.allclose(out_f32, ref, atol=2e-2, rtol=2e-2)
    assert jnp.allclose(out, ref, atol=1e-1, rtol=1e-1)                  # bf16 sanity

    # direct check of the fused block-diagonal gram kernel vs plain-JAX einsums
    F1 = in_features + 1
    e_v = jnp.exp(params["log_prec_lr"] * params["log_prec_scaled"]).reshape(-1)
    u_v = params["u"].reshape(-1)
    Xg = jnp.concatenate([X[:, :M, :], jnp.ones((S, M, 1), jnp.float32)], -1)
    xgat_chk = jnp.concatenate(
        [jnp.swapaxes(Xg, 1, 2),
         jnp.broadcast_to(u_v[None, None, :], (S, 1, M))], axis=1)       # (S, F+1, M)
    XLX_p, XLY_p = gram_pallas(xgat_chk, e_v[None, :], F=F1, sb=1)
    XLX_r = jnp.einsum('srf,r,srg->sfg', Xg, e_v, Xg)
    XLY_r = jnp.einsum('srf,r->sf', Xg, e_v * u_v)
    assert jnp.allclose(XLX_p[:, 0], XLX_r, atol=5e-4, rtol=1e-3)
    assert jnp.allclose(XLY_p[:, 0, 0], XLY_r, atol=5e-4, rtol=1e-3)

    # --- case 2: inducing_batch > N (inducing rows span several blocks) ----
    S2, N2, in2, out2, M2 = 2, 4, 5, 3, 10
    X2 = jax.random.normal(kx2, (S2, N2, in2), dtype=jnp.float32)
    params2 = make_params(ku2, M2)
    kw2 = dict(in_features=in2, out_features=out2, bias=True,
               inducing_batch=M2, key=kz2)
    out2_ = gi_linear_full_prec_forward(X2, params2,
                                        apply_compute_dtype=jnp.float32, **kw2)
    out2_ = jax.block_until_ready(out2_)
    ref2 = reference_forward(X2, params2, **kw2)
    assert out2_.shape == (S2, N2, out2)
    assert jnp.allclose(out2_, ref2, atol=2e-2, rtol=2e-2)

    print("KERNEL_OK")
</pallas_src>

<mosaic_0001>
module attributes {stable_mosaic.version = 11 : i64} {
  func.func @_gram_kernel(%arg0: i32, %arg1: memref<2x9x8xf32, #tpu.memory_space<vmem>>, %arg2: memref<1x8xf32, #tpu.memory_space<vmem>>, %arg3: memref<2x1x8x8xf32, #tpu.memory_space<vmem>>, %arg4: memref<2x1x1x8xf32, #tpu.memory_space<vmem>>) attributes {dimension_semantics = [#tpu.dimension_semantics<parallel>], iteration_bounds = array<i64: 1>, scalar_prefetch = 0 : i64, scratch_operands = 0 : i64, tpu.core_type = #tpu.core_type<tc>, window_params = [{transform_indices = @transform_0, window_bounds = array<i64: 2, 9, 8>}, {pipeline_mode = #tpu.pipeline_mode<synchronous>, transform_indices = @transform_1, window_bounds = array<i64: 1, 8>}, {transform_indices = @transform_2, window_bounds = array<i64: 2, 1, 8, 8>}, {transform_indices = @transform_3, window_bounds = array<i64: 2, 1, 1, 8>}]} {
    %c0 = arith.constant 0 : index
    %c0_0 = arith.constant 0 : index
    %c0_1 = arith.constant 0 : index
    %0 = vector.load %arg1[%c0, %c0_0, %c0_1] : memref<2x9x8xf32, #tpu.memory_space<vmem>>, vector<1x9x8xf32>
    %1 = vector.shape_cast %0 : vector<1x9x8xf32> to vector<9x8xf32>
    %c0_2 = arith.constant 0 : index
    %c0_3 = arith.constant 0 : index
    %2 = vector.load %arg2[%c0_2, %c0_3] : memref<1x8xf32, #tpu.memory_space<vmem>>, vector<1x8xf32>
    %3 = vector.broadcast %2 : vector<1x8xf32> to vector<9x8xf32>
    %4 = arith.mulf %1, %3 : vector<9x8xf32>
    %cst = arith.constant dense<0.000000e+00> : vector<9x9xf32>
    %5 = tpu.matmul %4, %1, %cst {dimension_numbers = #tpu.dot_dimension_numbers<[1], [1], [0], [0], [0, 0, 1, 0], [], []>} : vector<9x8xf32>, vector<9x8xf32>, vector<9x9xf32> -> vector<9x9xf32>
    %6 = vector.extract_strided_slice %5 {offsets = [0, 0], sizes = [8, 8], strides = [1, 1]} : vector<9x9xf32> to vector<8x8xf32>
    %c0_4 = arith.constant 0 : index
    %c0_5 = arith.constant 0 : index
    %c0_6 = arith.constant 0 : index
    %c0_7 = arith.constant 0 : index
    %7 = vector.load %arg3[%c0_4, %c0_5, %c0_6, %c0_7] : memref<2x1x8x8xf32, #tpu.memory_space<vmem>>, vector<1x1x8x8xf32>
    %8 = vector.shape_cast %7 : vector<1x1x8x8xf32> to vector<8x8xf32>
    %9 = vector.shape_cast %6 : vector<8x8xf32> to vector<1x1x8x8xf32>
    tpu.vector_store %arg3[%c0_4, %c0_5, %c0_6, %c0_7], %9 {strides = array<i32>} : memref<2x1x8x8xf32, #tpu.memory_space<vmem>>, vector<1x1x8x8xf32>,
    %10 = vector.extract_strided_slice %5 {offsets = [8, 0], sizes = [1, 8], strides = [1, 1]} : vector<9x9xf32> to vector<1x8xf32>
    %c0_8 = arith.constant 0 : index
    %c0_9 = arith.constant 0 : index
    %c0_10 = arith.constant 0 : index
    %c0_11 = arith.constant 0 : index
    %11 = vector.load %arg4[%c0_8, %c0_9, %c0_10, %c0_11] : memref<2x1x1x8xf32, #tpu.memory_space<vmem>>, vector<1x1x1x8xf32>
    %12 = vector.shape_cast %11 : vector<1x1x1x8xf32> to vector<1x8xf32>
    %13 = vector.shape_cast %10 : vector<1x8xf32> to vector<1x1x1x8xf32>
    tpu.vector_store %arg4[%c0_8, %c0_9, %c0_10, %c0_11], %13 {strides = array<i32>} : memref<2x1x1x8xf32, #tpu.memory_space<vmem>>, vector<1x1x1x8xf32>,
    %c1 = arith.constant 1 : index
    %c0_12 = arith.constant 0 : index
    %c0_13 = arith.constant 0 : index
    %14 = vector.load %arg1[%c1, %c0_12, %c0_13] : memref<2x9x8xf32, #tpu.memory_space<vmem>>, vector<1x9x8xf32>
    %15 = vector.shape_cast %14 : vector<1x9x8xf32> to vector<9x8xf32>
    %c0_14 = arith.constant 0 : index
    %c0_15 = arith.constant 0 : index
    %16 = vector.load %arg2[%c0_14, %c0_15] : memref<1x8xf32, #tpu.memory_space<vmem>>, vector<1x8xf32>
    %17 = vector.broadcast %16 : vector<1x8xf32> to vector<9x8xf32>
    %18 = arith.mulf %15, %17 : vector<9x8xf32>
    %cst_16 = arith.constant dense<0.000000e+00> : vector<9x9xf32>
    %19 = tpu.matmul %18, %15, %cst_16 {dimension_numbers = #tpu.dot_dimension_numbers<[1], [1], [0], [0], [0, 0, 1, 0], [], []>} : vector<9x8xf32>, vector<9x8xf32>, vector<9x9xf32> -> vector<9x9xf32>
    %20 = vector.extract_strided_slice %19 {offsets = [0, 0], sizes = [8, 8], strides = [1, 1]} : vector<9x9xf32> to vector<8x8xf32>
    %c1_17 = arith.constant 1 : index
    %c0_18 = arith.constant 0 : index
    %c0_19 = arith.constant 0 : index
    %c0_20 = arith.constant 0 : index
    %21 = vector.load %arg3[%c1_17, %c0_18, %c0_19, %c0_20] : memref<2x1x8x8xf32, #tpu.memory_space<vmem>>, vector<1x1x8x8xf32>
    %22 = vector.shape_cast %21 : vector<1x1x8x8xf32> to vector<8x8xf32>
    %23 = vector.shape_cast %20 : vector<8x8xf32> to vector<1x1x8x8xf32>
    tpu.vector_store %arg3[%c1_17, %c0_18, %c0_19, %c0_20], %23 {strides = array<i32>} : memref<2x1x8x8xf32, #tpu.memory_space<vmem>>, vector<1x1x8x8xf32>,
    %24 = vector.extract_strided_slice %19 {offsets = [8, 0], sizes = [1, 8], strides = [1, 1]} : vector<9x9xf32> to vector<1x8xf32>
    %c1_21 = arith.constant 1 : index
    %c0_22 = arith.constant 0 : index
    %c0_23 = arith.constant 0 : index
    %c0_24 = arith.constant 0 : index
    %25 = vector.load %arg4[%c1_21, %c0_22, %c0_23, %c0_24] : memref<2x1x1x8xf32, #tpu.memory_space<vmem>>, vector<1x1x1x8xf32>
    %26 = vector.shape_cast %25 : vector<1x1x1x8xf32> to vector<1x8xf32>
    %27 = vector.shape_cast %24 : vector<1x8xf32> to vector<1x1x1x8xf32>
    tpu.vector_store %arg4[%c1_21, %c0_22, %c0_23, %c0_24], %27 {strides = array<i32>} : memref<2x1x1x8xf32, #tpu.memory_space<vmem>>, vector<1x1x1x8xf32>,
    return
  }
  func.func @transform_0(%arg0: i32) -> (i32, i32, i32) {
    %c0_i32 = arith.constant 0 : i32
    %c0_i32_0 = arith.constant 0 : i32
    %c0_i32_1 = arith.constant 0 : i32
    return %arg0, %c0_i32, %c0_i32_0 : i32, i32, i32
  }
  func.func @transform_1(%arg0: i32) -> (i32, i32) {
    %c0_i32 = arith.constant 0 : i32
    %c0_i32_0 = arith.constant 0 : i32
    %c0_i32_1 = arith.constant 0 : i32
    return %c0_i32, %c0_i32_0 : i32, i32
  }
  func.func @transform_2(%arg0: i32) -> (i32, i32, i32, i32) {
    %c0_i32 = arith.constant 0 : i32
    %c0_i32_0 = arith.constant 0 : i32
    %c0_i32_1 = arith.constant 0 : i32
    %c0_i32_2 = arith.constant 0 : i32
    return %arg0, %c0_i32, %c0_i32_0, %c0_i32_1 : i32, i32, i32, i32
  }
  func.func @transform_3(%arg0: i32) -> (i32, i32, i32, i32) {
    %c0_i32 = arith.constant 0 : i32
    %c0_i32_0 = arith.constant 0 : i32
    %c0_i32_1 = arith.constant 0 : i32
    %c0_i32_2 = arith.constant 0 : i32
    return %arg0, %c0_i32, %c0_i32_0, %c0_i32_1 : i32, i32, i32, i32
  }
}

</mosaic_0001>

<llo_original>
// kernel: tpu_custom_call.1
$region0: #{tpu_custom_call.1}
  #allocation0 [shape = 'u32[]', space=smem, size = 0x4, offset = 0x4, fixed_abs, tag = 'smem constant byte address 0x4 - core index']
  #allocation1 [shape = 'u32[72,128]{1,0:T(1,128)}', space=vmem, size = 0x9000, scoped, tag = 'internal scratch']
  %s0 = inlined_call_operand.vmem [shape: f32[2,9,8], index: 0, kind: input, shape index: {}]
  %s1 = inlined_call_operand.vmem [shape: f32[1,8], index: 1, kind: input, shape index: {}]
  %s2 = inlined_call_operand.hbm [shape: f32[2,1,8,8], index: 2, kind: output, shape index: {0}]
  %s3 = inlined_call_operand.hbm [shape: f32[2,1,1,8], index: 3, kind: output, shape index: {1}]
  %4 = xla_tuple %s2, %s3
  %s5 = sld [smem:[#allocation0]]
  $region26: #{tpu_custom_call.1} parent=0
    _
  %s7 = ssub.s32 1, %s5
  %s8 = scalar_select 0, %s7, %s5
  $region1: #{tpu_custom_call.1} parent=0
    #allocation2 [shape = 'u8[8192]{0}', space=vmem, size = 0x2000, scoped, tag = 'output window, operand 0, single buffered']
    #allocation3 [shape = 's32[1]{0}', space=sflag, size = 0x4, scoped, tag = 'scoped memory for tpu_custom_call.1']
    #allocation4 [shape = 'u8[1024]{0}', space=vmem, size = 0x400, scoped, tag = 'output window, operand 1, single buffered']
    #allocation5 [shape = 's32[1]{0}', space=sflag, size = 0x4, scoped, tag = 'scoped memory for tpu_custom_call.1']
    %9 = vsyncpa [#allocation3], 0
    %10 = vsyncpa [#allocation5], 0
    // Predicated region
    $region2: #{tpu_custom_call.1} parent=1 // pred_check
      _
    $region3: #{tpu_custom_call.1} parent=1 // pred_check_branch
      %12 = sbr.rel (0) target = $region5
    $region4: #{tpu_custom_call.1} parent=1 // pred_region
      _
    $region5: #{tpu_custom_call.1} parent=1 // pred_fallthru
      _
    // Predicated region
    $region6: #{tpu_custom_call.1} parent=1 // pred_check
      _
    $region7: #{tpu_custom_call.1} parent=1 // pred_check_branch
      %14 = sbr.rel (0) target = $region9
    $region8: #{tpu_custom_call.1} parent=1 // pred_region
      _
    $region9: #{tpu_custom_call.1} parent=1 // pred_fallthru
      _
    %v15 = vld [vmem:[%s0] sm:$0xff]
    %v16 = vld [vmem:[%s0 + $0x8] sm:$0x1]
    %v17 = vld [vmem:[%s1] sm:$0x1]
    %v19 = vperm.slane %v17, 0
    %v21 = vmul.f32 %v15, %v19
    %v22 = vmul.f32 %v16, %v19
    %vm23 = vcmask 64512
    %v25 = vsel %vm23, %v21, 0
    %v28 = vsel %vm23, %v22, 0
    %v31 = vsel %vm23, %v15, 0
    %v34 = vsel %vm23, %v16, 0
    %36 = vmatpush.xpose.msra.mxu0 0.0
    %37 = vmatpush.xpose.msra.mxu0 0.0
    %38 = vmatpush.xpose.msra.mxu0 0.0
    %39 = vmatpush.xpose.msra.mxu0 0.0
    %40 = vmatpush.xpose.msra.mxu0 0.0
    %41 = vmatpush.xpose.msra.mxu0 0.0
    %42 = vmatpush.xpose.msra.mxu0 0.0
    %43 = vmatpush.xpose.msra.mxu0 0.0
    %44 = vmatpush.xpose.msra.mxu0 0.0
    %45 = vmatpush.xpose.msra.mxu0 0.0
    %46 = vmatpush.xpose.msra.mxu0 0.0
    %47 = vmatpush.xpose.msra.mxu0 0.0
    %48 = vmatpush.xpose.msra.mxu0 0.0
    %49 = vmatpush.xpose.msra.mxu0 0.0
    %50 = vmatpush.xpose.msra.mxu0 %v34
    %51 = vmatpush.xpose.msra.mxu0 %v31
    %52 = vmatmul.f32.gmra.mxu0 %v25
    %v53 = vpop.f32.mrf.mxu0
    %v54 = vadd.f32 0.0, %v53
    %55 = vmatmul.f32.gmra.mxu0 %v28
    %v56 = vpop.f32.mrf.mxu0
    %v57 = vadd.f32 0.0, %v56
    %58 = vdwg.mxu0
    %59 = vst.msk [vmem:[#allocation2] sm:$0xff] %vm23, %v54
    %vm60 = vcmask 57344
    %61 = vst.msk [vmem:[#allocation4] sm:$0x1] %vm60, %v57
    %s62 = scalar_lea.vmem %s0, 16
    %v63 = vld [vmem:[%s62] sm:$0xff]
    %v64 = vld [vmem:[%s62 + $0x8] sm:$0x1]
    %v65 = vld [vmem:[%s1] sm:$0x1]
    %v67 = vperm.slane %v65, 0
    %v69 = vmul.f32 %v63, %v67
    %v70 = vmul.f32 %v64, %v67
    %v72 = vsel %vm23, %v69, 0
    %v75 = vsel %vm23, %v70, 0
    %v78 = vsel %vm23, %v63, 0
    %v81 = vsel %vm23, %v64, 0
    %83 = vmatpush.xpose.msra.mxu0 0.0
    %84 = vmatpush.xpose.msra.mxu0 0.0
    %85 = vmatpush.xpose.msra.mxu0 0.0
    %86 = vmatpush.xpose.msra.mxu0 0.0
    %87 = vmatpush.xpose.msra.mxu0 0.0
    %88 = vmatpush.xpose.msra.mxu0 0.0
    %89 = vmatpush.xpose.msra.mxu0 0.0
    %90 = vmatpush.xpose.msra.mxu0 0.0
    %91 = vmatpush.xpose.msra.mxu0 0.0
    %92 = vmatpush.xpose.msra.mxu0 0.0
    %93 = vmatpush.xpose.msra.mxu0 0.0
    %94 = vmatpush.xpose.msra.mxu0 0.0
    %95 = vmatpush.xpose.msra.mxu0 0.0
    %96 = vmatpush.xpose.msra.mxu0 0.0
    %97 = vmatpush.xpose.msra.mxu0 %v81
    %98 = vmatpush.xpose.msra.mxu0 %v78
    %99 = vmatmul.f32.gmra.mxu0 %v72
    %v100 = vpop.f32.mrf.mxu0
    %v101 = vadd.f32 0.0, %v100
    %102 = vmatmul.f32.gmra.mxu0 %v75
    %v103 = vpop.f32.mrf.mxu0
    %v104 = vadd.f32 0.0, %v103
    %105 = vdwg.mxu0
    %s106 = scalar_lea.vmem [#allocation2], 8
    %107 = vst.msk [vmem:[%s106] sm:$0xff] %vm23, %v101
    %s108 = scalar_lea.vmem [#allocation4], 1
    %109 = vst.msk [vmem:[%s108] sm:$0x1] %vm60, %v104
    // Predicated region
    $region10: #{tpu_custom_call.1} parent=1 // pred_check
      _
    $region11: #{tpu_custom_call.1} parent=1 // pred_check_branch
      %111 = sbr.rel (0) target = $region13
    $region12: #{tpu_custom_call.1} parent=1 // pred_region
      %113 = vsyncadd [#allocation3], 0
      %s114 = sshll.u32 [#allocation2], 4
      %s115 = int_to_ptr.vmem [resolvable:$true] %s114
      %s116 = sshll.u32 %s2, 4
      %s117 = int_to_ptr.hbm [resolvable:$true] %s116
      %122 = dma.vmem_to_hbm [thread:$0]  %s115, 256, %s117, [#allocation3], 128, 128, 8
    $region13: #{tpu_custom_call.1} parent=1 // pred_fallthru
      _
    // Predicated region
    $region14: #{tpu_custom_call.1} parent=1 // pred_check
      _
    $region15: #{tpu_custom_call.1} parent=1 // pred_check_branch
      %124 = sbr.rel (0) target = $region17
    $region16: #{tpu_custom_call.1} parent=1 // pred_region
      %126 = vsyncadd [#allocation5], 0
      %s127 = sshll.u32 [#allocation4], 4
      %s128 = int_to_ptr.vmem [resolvable:$true] %s127
      %s129 = sshll.u32 %s3, 4
      %s130 = int_to_ptr.hbm [resolvable:$true] %s129
      %135 = dma.vmem_to_hbm [thread:$0]  %s128, 32, %s130, [#allocation5], 16, 16, 1
    $region17: #{tpu_custom_call.1} parent=1 // pred_fallthru
      _
    // Predicated region
    $region18: #{tpu_custom_call.1} parent=1 // pred_check
      _
    $region19: #{tpu_custom_call.1} parent=1 // pred_check_branch
      %137 = sbr.rel (0) target = $region21
    $region20: #{tpu_custom_call.1} parent=1 // pred_region
      %139 = dma.done [#allocation3], 256
    $region21: #{tpu_custom_call.1} parent=1 // pred_fallthru
      _
    // Predicated region
    $region22: #{tpu_custom_call.1} parent=1 // pred_check
      _
    $region23: #{tpu_custom_call.1} parent=1 // pred_check_branch
      %141 = sbr.rel (0) target = $region25
    $region24: #{tpu_custom_call.1} parent=1 // pred_region
      %143 = dma.done [#allocation5], 32
    $region25: #{tpu_custom_call.1} parent=1 // pred_fallthru
      _
    %144 = vsyncpa [#allocation3], 1
    %145 = vsyncpa [#allocation5], 1

</llo_original>
